<compile_context>
chip_gen: v7x
topology: tpu7x:2x2x1
jax: 0.10.0
libtpu: 0.0.40
codegen_flags: <defaults>
</compile_context>

<pallas_src>
import functools
import math

import jax
import jax.numpy as jnp
from jax.experimental import pallas as pl
from jax.experimental.pallas import tpu as pltpu


def _round_up(v, m):
    return ((v + m - 1) // m) * m


def _round_down(v, m):
    return max(m, (v // m) * m)


def _tpu_vmem_capacity_bytes():
    try:
        return int(pltpu.get_tpu_info().vmem_capacity_bytes)
    except Exception:
        return 64 * 1024 * 1024  # conservative fallback (v7x-sized)


# ----------------------------------------------------------------------------
# Kernels
# ----------------------------------------------------------------------------
def _proj_single_k_kernel(x_ref, w_ref, b_ref, o_ref, *, approx_recip):
    # Whole K resident: one MXU pass, bias + norm + rescale fused, no scratch.
    xt = x_ref[...].astype(w_ref.dtype)                 # per-tile cast (VPU)
    proj = jnp.dot(xt, w_ref[...], preferred_element_type=jnp.float32)
    proj = proj + b_ref[...]
    # Padded output columns are exactly 0 (zero-padded W/b), so the sum over the
    # padded lane axis equals the true squared norm.
    norm = jnp.sqrt(jnp.sum(proj * proj, axis=-1, keepdims=True))
    inv = pl.reciprocal(1.0 + norm, approx=approx_recip)
    o_ref[...] = (proj * inv).astype(o_ref.dtype)


def _proj_multi_k_kernel(x_ref, w_ref, b_ref, o_ref, acc_ref, *, approx_recip):
    # K-axis reduction with an f32 VMEM accumulator resident across the K loop.
    k = pl.program_id(1)

    @pl.when(k == 0)
    def _():
        acc_ref[...] = jnp.zeros_like(acc_ref)

    xt = x_ref[...].astype(w_ref.dtype)                 # per-tile cast (VPU)
    acc_ref[...] += jnp.dot(xt, w_ref[...], preferred_element_type=jnp.float32)

    @pl.when(k == pl.num_programs(1) - 1)
    def _():
        proj = acc_ref[...] + b_ref[...]
        norm = jnp.sqrt(jnp.sum(proj * proj, axis=-1, keepdims=True))
        inv = pl.reciprocal(1.0 + norm, approx=approx_recip)
        o_ref[...] = (proj * inv).astype(o_ref.dtype)


# ----------------------------------------------------------------------------
# Wrapper
# ----------------------------------------------------------------------------
def hyperbolic_projection(x, w, b, *, matmul_dtype=None, tm=None, tk=None,
                          vmem_budget_bytes=None):
    """Poincare projection: (x @ w + b) / (1 + ||x @ w + b||_2).

    x: [..., D_in], w: [D_in, D_out] (pre-transposed PyTorch weight), b: [D_out].
    matmul_dtype: MXU operand dtype; defaults to bf16 for f32 inputs (accumulate /
      norm / rescale stay f32). Pass jnp.float32 for an exact path. On v7x an fp8
      dtype may be supplied if accuracy allows (its MXU is bf16+fp8).
    """
    d_in, d_out = w.shape
    lead_shape = x.shape[:-1]
    m = math.prod(lead_shape) if lead_shape else 1
    out_dtype = x.dtype

    if matmul_dtype is None:
        mm_dtype = jnp.bfloat16 if x.dtype == jnp.float32 else x.dtype
    else:
        mm_dtype = matmul_dtype
    mm_dtype = jnp.dtype(mm_dtype)
    approx_recip = mm_dtype != jnp.dtype(jnp.float32)

    # ---- Per-generation VMEM budgeting --------------------------------------
    cap = _tpu_vmem_capacity_bytes()
    if cap <= 64 * 1024 * 1024:            # v7x-class: 64 MiB / TC, 2 TCs
        default_budget = 36 * 1024 * 1024
        limit_cap = 56 * 1024 * 1024
        num_tc = 2
        default_tm, default_tk = 512, 512
    else:                                   # v5e / v6e: 128 MiB, 1 TC
        default_budget = 96 * 1024 * 1024
        limit_cap = 110 * 1024 * 1024
        num_tc = 1
        default_tm, default_tk = 1024, 1024
    budget = int(vmem_budget_bytes) if vmem_budget_bytes is not None else default_budget

    # ---- Tile geometry -------------------------------------------------------
    n_pad = _round_up(d_out, 128)           # lane-dense output, unmasked stores
    k_pad0 = _round_up(d_in, 128)           # MXU-aligned K

    row_align = 16 if mm_dtype == jnp.dtype(jnp.bfloat16) else 8
    tm = default_tm if tm is None else tm
    tk0 = default_tk if tk is None else tk

    tm = min(tm, _round_up(m, row_align))
    tm = max(row_align, (tm // row_align) * row_align)
    # Keep both v7x TensorCores busy: >= 2 row blocks for mid/large m.
    if num_tc >= 2 and m >= 512:
        tm = min(tm, _round_up((m + 1) // 2, row_align))

    x_bytes = jnp.dtype(x.dtype).itemsize   # x stays in its own dtype in HBM/VMEM
    mm_bytes = mm_dtype.itemsize
    out_bytes = jnp.dtype(out_dtype).itemsize

    def vmem_estimate(tm_, tk_, with_acc):
        est = (2 * tm_ * tk_ * x_bytes        # double-buffered x tiles
               + 2 * tk_ * n_pad * mm_bytes   # double-buffered w tiles
               + 2 * n_pad * 4                # bias
               + 2 * tm_ * n_pad * out_bytes)  # double-buffered out tiles
        if with_acc:
            est += tm_ * n_pad * 4            # f32 accumulator scratch
        return est

    tm_min = min(tm, 256)
    tk_min = 256

    # ---- Fast path: W fully resident (single K step, no accumulator) --------
    single_k = False
    k_pad = k_pad0
    tk = k_pad0
    if 2 * k_pad0 * n_pad * mm_bytes <= budget // 2:
        tm_try = tm
        while vmem_estimate(tm_try, k_pad0, False) > budget and tm_try > tm_min:
            tm_try = max(tm_min, _round_down(tm_try // 2, row_align))
        if vmem_estimate(tm_try, k_pad0, False) <= budget:
            tm, tk, single_k = tm_try, k_pad0, True
            k_pad = k_pad0

    if not single_k:
        # Shrink tk BEFORE tm: a longer sequential K loop is nearly free, while a
        # smaller tm cuts W reuse and the effective MXU M dimension.
        tk = max(128, min(tk0, k_pad0))
        while vmem_estimate(tm, tk, True) > budget and tk > tk_min:
            tk = max(tk_min, tk // 2)
        while vmem_estimate(tm, tk, True) > budget and tm > tm_min:
            tm = max(tm_min, _round_down(tm // 2, row_align))
        k_pad = _round_up(k_pad0, tk)
        if tk >= k_pad:                     # collapsed to one K step -> no scratch
            tk = k_pad
            single_k = True

    m_pad = _round_up(m, tm)

    # ---- Host-side prep: W/b are static weights (cast+pad once); x is only ---
    # ---- padded when necessary and cast per-tile inside the kernel. ----------
    x2d = x.reshape(m, d_in)
    if m_pad != m or k_pad != d_in:
        x2d = jnp.pad(x2d, ((0, m_pad - m), (0, k_pad - d_in)))
    w_p = w if w.dtype == mm_dtype else w.astype(mm_dtype)
    if k_pad != d_in or n_pad != d_out:
        w_p = jnp.pad(w_p, ((0, k_pad - d_in), (0, n_pad - d_out)))
    b_p = b.astype(jnp.float32).reshape(1, d_out)
    if n_pad != d_out:
        b_p = jnp.pad(b_p, ((0, 0), (0, n_pad - d_out)))

    est = vmem_estimate(tm, tk, not single_k)
    vmem_limit = min(limit_cap, max(32 * 1024 * 1024, int(est * 1.5)))

    if single_k:
        kernel = functools.partial(_proj_single_k_kernel, approx_recip=approx_recip)
        grid_spec = pltpu.PrefetchScalarGridSpec(
            num_scalar_prefetch=0,
            grid=(m_pad // tm,),
            in_specs=[
                pl.BlockSpec((tm, k_pad), lambda i: (i, 0)),      # x row tile
                pl.BlockSpec((k_pad, n_pad), lambda i: (0, 0)),   # W resident (one DMA)
                pl.BlockSpec((1, n_pad), lambda i: (0, 0)),       # bias
            ],
            out_specs=pl.BlockSpec((tm, n_pad), lambda i: (i, 0)),
        )
        dim_sem = ("parallel",)
    else:
        kernel = functools.partial(_proj_multi_k_kernel, approx_recip=approx_recip)
        grid_spec = pltpu.PrefetchScalarGridSpec(
            num_scalar_prefetch=0,
            grid=(m_pad // tm, k_pad // tk),
            in_specs=[
                pl.BlockSpec((tm, tk), lambda i, k: (i, k)),      # x row/K tile
                pl.BlockSpec((tk, n_pad), lambda i, k: (k, 0)),   # W K tile, full N
                pl.BlockSpec((1, n_pad), lambda i, k: (0, 0)),    # bias
            ],
            out_specs=pl.BlockSpec((tm, n_pad), lambda i, k: (i, 0)),
            scratch_shapes=[pltpu.VMEM((tm, n_pad), jnp.float32)],
        )
        dim_sem = ("parallel", "arbitrary")

    out = pl.pallas_call(
        kernel,
        out_shape=jax.ShapeDtypeStruct((m_pad, n_pad), out_dtype),
        grid_spec=grid_spec,
        compiler_params=pltpu.CompilerParams(
            dimension_semantics=dim_sem,
            vmem_limit_bytes=vmem_limit,
        ),
    )(x2d, w_p, b_p)

    return out[:m, :d_out].reshape(*lead_shape, d_out)


def _reference(x, w, b):
    proj = jnp.dot(x, w, precision=jax.lax.Precision.HIGHEST) + b
    norm = jnp.sqrt(jnp.sum(proj * proj, axis=-1, keepdims=True))
    return proj / (1.0 + norm)


if __name__ == "__main__":
    # --- Test 1: small shapes matching the module's forward. ---
    batch, seq, input_dim, output_dim = 2, 8, 32, 32
    key = jax.random.PRNGKey(0)
    kx, kw, kb = jax.random.split(key, 3)
    bound = 1.0 / math.sqrt(input_dim)
    # Weight stored pre-transposed: [D_in, D_out]  (== PyTorch W.T).
    w = jax.random.uniform(kw, (input_dim, output_dim),
                           minval=-bound, maxval=bound, dtype=jnp.float32)
    b = jax.random.uniform(kb, (output_dim,),
                           minval=-bound, maxval=bound, dtype=jnp.float32)
    x = jax.random.normal(kx, (batch, seq, input_dim), dtype=jnp.float32)
    ref = _reference(x, w, b)

    # 1a: exact f32 MXU path.
    out_f32 = jax.block_until_ready(
        hyperbolic_projection(x, w, b, matmul_dtype=jnp.float32))
    assert out_f32.shape == (batch, seq, output_dim)
    assert jnp.allclose(out_f32, ref, atol=1e-5, rtol=1e-5)

    # 1b: default bf16-operand path (f32 accumulate / norm / rescale).
    out_bf16 = jax.block_until_ready(hyperbolic_projection(x, w, b))
    assert jnp.allclose(out_bf16, ref, atol=1e-2, rtol=1e-2)

    # --- Test 2: larger shape, W-resident single-K fast path, default bf16. ---
    M2, K2, N2 = 512, 512, 256
    key2 = jax.random.PRNGKey(1)
    kx2, kw2, kb2 = jax.random.split(key2, 3)
    bound2 = 1.0 / math.sqrt(K2)
    w2 = jax.random.uniform(kw2, (K2, N2), minval=-bound2, maxval=bound2,
                            dtype=jnp.float32)
    b2 = jax.random.uniform(kb2, (N2,), minval=-bound2, maxval=bound2,
                            dtype=jnp.float32)
    x2 = jax.random.normal(kx2, (M2, K2), dtype=jnp.float32)
    out2 = jax.block_until_ready(hyperbolic_projection(x2, w2, b2))
    ref2 = _reference(x2, w2, b2)
    assert out2.shape == (M2, N2)
    assert jnp.allclose(out2, ref2, atol=2e-2, rtol=2e-2)

    # --- Test 3: force the multi-K accumulator path with a tiny VMEM budget. ---
    M3, K3, N3 = 256, 2048, 256
    key3 = jax.random.PRNGKey(2)
    kx3, kw3, kb3 = jax.random.split(key3, 3)
    bound3 = 1.0 / math.sqrt(K3)
    w3 = jax.random.uniform(kw3, (K3, N3), minval=-bound3, maxval=bound3,
                            dtype=jnp.float32)
    b3 = jax.random.uniform(kb3, (N3,), minval=-bound3, maxval=bound3,
                            dtype=jnp.float32)
    x3 = jax.random.normal(kx3, (M3, K3), dtype=jnp.float32)
    out3 = jax.block_until_ready(
        hyperbolic_projection(x3, w3, b3, vmem_budget_bytes=2 * 1024 * 1024))
    ref3 = _reference(x3, w3, b3)
    assert out3.shape == (M3, N3)
    assert jnp.allclose(out3, ref3, atol=2e-2, rtol=2e-2)

    # TODO(synk): mobius_add() is defined on the module but unused by forward();
    # it is intentionally not implemented here.
    print("KERNEL_OK")
</pallas_src>

<mosaic_0001>
module attributes {stable_mosaic.version = 11 : i64} {
  func.func @_proj_single_k_kernel(%arg0: i32, %arg1: memref<16x128xf32, #tpu.memory_space<vmem>>, %arg2: memref<128x128xf32, #tpu.memory_space<vmem>>, %arg3: memref<1x128xf32, #tpu.memory_space<vmem>>, %arg4: memref<16x128xf32, #tpu.memory_space<vmem>>) attributes {dimension_semantics = [#tpu.dimension_semantics<parallel>], iteration_bounds = array<i64: 1>, scalar_prefetch = 0 : i64, scratch_operands = 0 : i64, tpu.core_type = #tpu.core_type<tc>, window_params = [{transform_indices = @transform_0, window_bounds = array<i64: 16, 128>}, {pipeline_mode = #tpu.pipeline_mode<synchronous>, transform_indices = @transform_1, window_bounds = array<i64: 128, 128>}, {pipeline_mode = #tpu.pipeline_mode<synchronous>, transform_indices = @transform_2, window_bounds = array<i64: 1, 128>}, {transform_indices = @transform_3, window_bounds = array<i64: 16, 128>}]} {
    %c0 = arith.constant 0 : index
    %c0_0 = arith.constant 0 : index
    %0 = vector.load %arg1[%c0, %c0_0] : memref<16x128xf32, #tpu.memory_space<vmem>>, vector<16x128xf32>
    %c0_1 = arith.constant 0 : index
    %c0_2 = arith.constant 0 : index
    %1 = vector.load %arg2[%c0_1, %c0_2] : memref<128x128xf32, #tpu.memory_space<vmem>>, vector<128x128xf32>
    %cst = arith.constant dense<0.000000e+00> : vector<16x128xf32>
    %2 = tpu.matmul %0, %1, %cst {dimension_numbers = #tpu.dot_dimension_numbers<[1], [0], [0], [1], [0, 0, 1, 1], [], []>} : vector<16x128xf32>, vector<128x128xf32>, vector<16x128xf32> -> vector<16x128xf32>
    %c0_3 = arith.constant 0 : index
    %c0_4 = arith.constant 0 : index
    %3 = vector.load %arg3[%c0_3, %c0_4] : memref<1x128xf32, #tpu.memory_space<vmem>>, vector<1x128xf32>
    %4 = vector.broadcast %3 : vector<1x128xf32> to vector<16x128xf32>
    %5 = arith.addf %2, %4 : vector<16x128xf32>
    %6 = arith.mulf %5, %5 : vector<16x128xf32>
    %cst_5 = arith.constant dense<0.000000e+00> : vector<16xf32>
    %7 = vector.multi_reduction <add>, %6, %cst_5 [1] : vector<16x128xf32> to vector<16xf32>
    %8 = vector.shape_cast %7 : vector<16xf32> to vector<16x1xf32>
    %9 = math.sqrt %8 : vector<16x1xf32>
    %cst_6 = arith.constant 1.000000e+00 : f32
    %10 = vector.broadcast %cst_6 : f32 to vector<16x1xf32>
    %11 = arith.addf %10, %9 : vector<16x1xf32>
    %12 = tpu.reciprocal %11 : vector<16x1xf32> -> vector<16x1xf32>
    %13 = vector.broadcast %12 : vector<16x1xf32> to vector<16x128xf32>
    %14 = arith.mulf %5, %13 : vector<16x128xf32>
    %c0_7 = arith.constant 0 : index
    %c0_8 = arith.constant 0 : index
    %15 = vector.load %arg4[%c0_7, %c0_8] : memref<16x128xf32, #tpu.memory_space<vmem>>, vector<16x128xf32>
    tpu.vector_store %arg4[%c0_7, %c0_8], %14 {strides = array<i32>} : memref<16x128xf32, #tpu.memory_space<vmem>>, vector<16x128xf32>,
    return
  }
  func.func @transform_0(%arg0: i32) -> (i32, i32) {
    %c0_i32 = arith.constant 0 : i32
    %c0_i32_0 = arith.constant 0 : i32
    return %arg0, %c0_i32 : i32, i32
  }
  func.func @transform_1(%arg0: i32) -> (i32, i32) {
    %c0_i32 = arith.constant 0 : i32
    %c0_i32_0 = arith.constant 0 : i32
    %c0_i32_1 = arith.constant 0 : i32
    return %c0_i32, %c0_i32_0 : i32, i32
  }
  func.func @transform_2(%arg0: i32) -> (i32, i32) {
    %c0_i32 = arith.constant 0 : i32
    %c0_i32_0 = arith.constant 0 : i32
    %c0_i32_1 = arith.constant 0 : i32
    return %c0_i32, %c0_i32_0 : i32, i32
  }
  func.func @transform_3(%arg0: i32) -> (i32, i32) {
    %c0_i32 = arith.constant 0 : i32
    %c0_i32_0 = arith.constant 0 : i32
    return %arg0, %c0_i32 : i32, i32
  }
}

</mosaic_0001>

<llo_original>
// kernel: tpu_custom_call.1
$region0: #{tpu_custom_call.1}
  #allocation0 [shape = 'u32[]', space=smem, size = 0x4, offset = 0x4, fixed_abs, tag = 'smem constant byte address 0x4 - core index']
  #allocation1 [shape = 'u32[144,128]{1,0:T(1,128)}', space=vmem, size = 0x12000, scoped, tag = 'internal scratch']
  %s0 = inlined_call_operand.hbm [shape: f32[16,128], index: 0, kind: input, shape index: {}]
  %s1 = inlined_call_operand.hbm [shape: f32[128,128], index: 1, kind: input, shape index: {}]
  %s2 = inlined_call_operand.vmem [shape: f32[1,128], index: 2, kind: input, shape index: {}]
  %s3 = inlined_call_operand.hbm [shape: f32[16,128], index: 3, kind: output, shape index: {}]
  %s4 = sld [smem:[#allocation0]]
  $region30: #{tpu_custom_call.1} parent=0
    _
  %s6 = ssub.s32 1, %s4
  %s7 = scalar_select 0, %s6, %s4
  $region1: #{tpu_custom_call.1} parent=0
    #allocation2 [shape = 'u8[8192]{0}', space=vmem, size = 0x2000, scoped, tag = 'input window, operand 0, single buffered']
    #allocation3 [shape = 's32[1]{0}', space=sflag, size = 0x4, scoped, tag = 'scoped memory for tpu_custom_call.1']
    #allocation4 [shape = 's32[1]{0}', space=sflag, size = 0x4, scoped, tag = 'scoped memory for tpu_custom_call.1']
    #allocation5 [shape = 'u8[65536]{0}', space=vmem, size = 0x10000, scoped, tag = 'input window, operand 1, single buffered']
    #allocation6 [shape = 's32[1]{0}', space=sflag, size = 0x4, scoped, tag = 'scoped memory for tpu_custom_call.1']
    #allocation7 [shape = 'u8[8192]{0}', space=vmem, size = 0x2000, scoped, tag = 'output window, operand 0, single buffered']
    %8 = vsyncpa [#allocation3], 0
    %9 = vsyncpa [#allocation6], 0
    %10 = vsyncpa [#allocation4], 0
    // Predicated region
    $region2: #{tpu_custom_call.1} parent=1 // pred_check
      _
    $region3: #{tpu_custom_call.1} parent=1 // pred_check_branch
      %12 = sbr.rel (0) target = $region5
    $region4: #{tpu_custom_call.1} parent=1 // pred_region
      %s14 = ssub.s32 256, 256
      %15 = vsyncadd [#allocation3], %s14
      %s16 = sshll.u32 [#allocation2], 4
      %s17 = int_to_ptr.vmem [resolvable:$true] %s16
      %22 = dma.hbm_to_vmem [thread:$0]  %s0, 256, %s17, [#allocation3], 128, 128, 8
    $region5: #{tpu_custom_call.1} parent=1 // pred_fallthru
      _
    // Predicated region
    $region6: #{tpu_custom_call.1} parent=1 // pred_check
      _
    $region7: #{tpu_custom_call.1} parent=1 // pred_check_branch
      %24 = sbr.rel (0) target = $region9
    $region8: #{tpu_custom_call.1} parent=1 // pred_region
      %s26 = ssub.s32 2048, 2048
      %27 = vsyncadd [#allocation6], %s26
      %s28 = sshll.u32 [#allocation5], 4
      %s29 = int_to_ptr.vmem [resolvable:$true] %s28
      %34 = dma.hbm_to_vmem [thread:$0]  %s1, 2048, %s29, [#allocation6], 128, 128, 8
    $region9: #{tpu_custom_call.1} parent=1 // pred_fallthru
      _
    // Predicated region
    $region10: #{tpu_custom_call.1} parent=1 // pred_check
      _
    $region11: #{tpu_custom_call.1} parent=1 // pred_check_branch
      %36 = sbr.rel (0) target = $region13
    $region12: #{tpu_custom_call.1} parent=1 // pred_region
      _
    $region13: #{tpu_custom_call.1} parent=1 // pred_fallthru
      _
    // Predicated region
    $region14: #{tpu_custom_call.1} parent=1 // pred_check
      _
    $region15: #{tpu_custom_call.1} parent=1 // pred_check_branch
      %38 = sbr.rel (0) target = $region17
    $region16: #{tpu_custom_call.1} parent=1 // pred_region
      %39 = dma.done [#allocation3], 256
    $region17: #{tpu_custom_call.1} parent=1 // pred_fallthru
      _
    // Predicated region
    $region18: #{tpu_custom_call.1} parent=1 // pred_check
      _
    $region19: #{tpu_custom_call.1} parent=1 // pred_check_branch
      %41 = sbr.rel (0) target = $region21
    $region20: #{tpu_custom_call.1} parent=1 // pred_region
      %42 = dma.done [#allocation6], 2048
    $region21: #{tpu_custom_call.1} parent=1 // pred_fallthru
      _
    %v43 = vld [vmem:[#allocation2] sm:$0xff]
    %v44 = vld [vmem:[#allocation2 + $0x8] sm:$0xff]
    %v45 = vld [vmem:[#allocation5] sm:$0xff]
    %v46 = vld [vmem:[#allocation5 + $0x8] sm:$0xff]
    %v47 = vld [vmem:[#allocation5 + $0x10] sm:$0xff]
    %v48 = vld [vmem:[#allocation5 + $0x18] sm:$0xff]
    %v49 = vld [vmem:[#allocation5 + $0x20] sm:$0xff]
    %v50 = vld [vmem:[#allocation5 + $0x28] sm:$0xff]
    %v51 = vld [vmem:[#allocation5 + $0x30] sm:$0xff]
    %v52 = vld [vmem:[#allocation5 + $0x38] sm:$0xff]
    %v53 = vld [vmem:[#allocation5 + $0x40] sm:$0xff]
    %v54 = vld [vmem:[#allocation5 + $0x48] sm:$0xff]
    %v55 = vld [vmem:[#allocation5 + $0x50] sm:$0xff]
    %v56 = vld [vmem:[#allocation5 + $0x58] sm:$0xff]
    %v57 = vld [vmem:[#allocation5 + $0x60] sm:$0xff]
    %v58 = vld [vmem:[#allocation5 + $0x68] sm:$0xff]
    %v59 = vld [vmem:[#allocation5 + $0x70] sm:$0xff]
    %v60 = vld [vmem:[#allocation5 + $0x78] sm:$0xff]
    %v61 = vld [vmem:[%s2] sm:$0x1]
    %v63 = vlaneseq
    %v64 = vshrl.u32 %v63, 7
    %v65 = vsub.s32 0, %v64
    %v66 = vrot.slane %v61, %v65
    %68 = vmatprep.subr.mxu0 0.0
    %69 = vmatpush1.msra.mxu0 %v45
    %70 = vmatprep.subr.mxu0 0.0
    %71 = vmatpush1.msra.mxu0 %v46
    %72 = vmatprep.subr.mxu0 0.0
    %73 = vmatpush1.msra.mxu0 %v47
    %74 = vmatprep.subr.mxu0 0.0
    %75 = vmatpush1.msra.mxu0 %v48
    %76 = vmatprep.subr.mxu0 0.0
    %77 = vmatpush1.msra.mxu0 %v49
    %78 = vmatprep.subr.mxu0 0.0
    %79 = vmatpush1.msra.mxu0 %v50
    %80 = vmatprep.subr.mxu0 0.0
    %81 = vmatpush1.msra.mxu0 %v51
    %82 = vmatprep.subr.mxu0 0.0
    %83 = vmatpush1.msra.mxu0 %v52
    %84 = vmatprep.subr.mxu0 0.0
    %85 = vmatpush1.msra.mxu0 %v53
    %86 = vmatprep.subr.mxu0 0.0
    %87 = vmatpush1.msra.mxu0 %v54
    %88 = vmatprep.subr.mxu0 0.0
    %89 = vmatpush1.msra.mxu0 %v55
    %90 = vmatprep.subr.mxu0 0.0
    %91 = vmatpush1.msra.mxu0 %v56
    %92 = vmatprep.subr.mxu0 0.0
    %93 = vmatpush1.msra.mxu0 %v57
    %94 = vmatprep.subr.mxu0 0.0
    %95 = vmatpush1.msra.mxu0 %v58
    %96 = vmatprep.subr.mxu0 0.0
    %97 = vmatpush1.msra.mxu0 %v59
    %98 = vmatprep.subr.mxu0 0.0
    %99 = vmatpush1.msra.mxu0 %v60
    %100 = vmatprep.subr.mxu0 0.0
    %101 = vmatpush1.msra.mxu0 0.0
    %102 = vmatprep.subr.mxu0 0.0
    %103 = vmatpush1.msra.mxu0 0.0
    %104 = vmatprep.subr.mxu0 0.0
    %105 = vmatpush1.msra.mxu0 0.0
    %106 = vmatprep.subr.mxu0 0.0
    %107 = vmatpush1.msra.mxu0 0.0
    %108 = vmatprep.subr.mxu0 0.0
    %109 = vmatpush1.msra.mxu0 0.0
    %110 = vmatprep.subr.mxu0 0.0
    %111 = vmatpush1.msra.mxu0 0.0
    %112 = vmatprep.subr.mxu0 0.0
    %113 = vmatpush1.msra.mxu0 0.0
    %114 = vmatprep.subr.mxu0 0.0
    %115 = vmatpush1.msra.mxu0 0.0
    %116 = vmatprep.subr.mxu0 0.0
    %117 = vmatpush1.msra.mxu0 0.0
    %118 = vmatprep.subr.mxu0 0.0
    %119 = vmatpush1.msra.mxu0 0.0
    %120 = vmatprep.subr.mxu0 0.0
    %121 = vmatpush1.msra.mxu0 0.0
    %122 = vmatprep.subr.mxu0 0.0
    %123 = vmatpush1.msra.mxu0 0.0
    %124 = vmatprep.subr.mxu0 0.0
    %125 = vmatpush1.msra.mxu0 0.0
    %126 = vmatprep.subr.mxu0 0.0
    %127 = vmatpush1.msra.mxu0 0.0
    %128 = vmatprep.subr.mxu0 0.0
    %129 = vmatpush1.msra.mxu0 0.0
    %130 = vmatprep.subr.mxu0 0.0
    %131 = vmatpush1.msra.mxu0 0.0
    %132 = vmatprep.mubr.f32.mxu0 0.0
    %133 = vmatmul.mubr.f32.gmra.mrb[0].mxu0 %v43
    %v134 = vpop.f32.mrb[0].mxu0
    %v135 = vadd.f32 %v66, %v134
    %v136 = vpop.f32.mrb[0].mxu0
    %137 = vmatprep.mubr.f32.mxu0 0.0
    %138 = vmatmul.mubr.f32.gmra.mrb[0].mxu0 %v44
    %v139 = vpop.f32.mrb[0].mxu0
    %v140 = vadd.f32 %v66, %v139
    %v141 = vpop.f32.mrb[0].mxu0
    %142 = vdwg.mxu0
    %v143 = vmul.f32 %v135, %v135
    %v144 = vmul.f32 %v140, %v140
    %145 = vadd.xlane.f32.xlu0 %v143
    %v146 = vpop.xlane.xlu0 %145
    %147 = vadd.xlane.f32.xlu0 %v144
    %v148 = vpop.xlane.xlu0 %147
    %v149 = vrsqrt.pop %v146
    %v150 = vmul.f32 %v146, %v149
    %vm151 = vcmp.eq.f32.partialorder %v146, inf
    %v152 = vsel %vm151, %v146, %v150
    %vm153 = vcmp.eq.f32.partialorder %v146, 0.0
    %v154 = vand.u32 %v146, 2147483648
    %v155 = vsel %vm153, %v154, %v152
    %v156 = vrsqrt.pop %v148
    %v157 = vmul.f32 %v148, %v156
    %vm158 = vcmp.eq.f32.partialorder %v148, inf
    %v159 = vsel %vm158, %v148, %v157
    %vm160 = vcmp.eq.f32.partialorder %v148, 0.0
    %v161 = vand.u32 %v148, 2147483648
    %v162 = vsel %vm160, %v161, %v159
    %v163 = vadd.f32 %v155, 1.0
    %v164 = vadd.f32 %v162, 1.0
    %v165 = vrcp.pop %v163
    %v166 = vrcp.pop %v164
    %v167 = vmul.f32 %v135, %v165
    %v168 = vmul.f32 %v140, %v166
    %169 = vst [vmem:[#allocation7] sm:$0xff] %v167
    %170 = vst [vmem:[#allocation7 + $0x8] sm:$0xff] %v168
    // Predicated region
    $region22: #{tpu_custom_call.1} parent=1 // pred_check
      _
    $region23: #{tpu_custom_call.1} parent=1 // pred_check_branch
      %172 = sbr.rel (0) target = $region25
    $region24: #{tpu_custom_call.1} parent=1 // pred_region
      %s174 = ssub.s32 256, 256
      %175 = vsyncadd [#allocation4], %s174
      %s176 = sshll.u32 [#allocation7], 4
      %s177 = int_to_ptr.vmem [resolvable:$true] %s176
      %182 = dma.vmem_to_hbm [thread:$0]  %s177, 256, %s3, [#allocation4], 128, 128, 8
    $region25: #{tpu_custom_call.1} parent=1 // pred_fallthru
      _
    // Predicated region
    $region26: #{tpu_custom_call.1} parent=1 // pred_check
      _
    $region27: #{tpu_custom_call.1} parent=1 // pred_check_branch
      %184 = sbr.rel (0) target = $region29
    $region28: #{tpu_custom_call.1} parent=1 // pred_region
      %185 = dma.done [#allocation4], 256
    $region29: #{tpu_custom_call.1} parent=1 // pred_fallthru
      _
    %186 = vsyncpa [#allocation3], 1
    %187 = vsyncpa [#allocation6], 1
    %188 = vsyncpa [#allocation4], 1

</llo_original>
